<compile_context>
chip_gen: v7x
topology: tpu7x:2x2x1
jax: 0.10.0
libtpu: 0.0.40
codegen_flags: <defaults>
</compile_context>

<pallas_src>
import numpy as np

import jax
import jax.numpy as jnp
from jax import lax
from jax.experimental import pallas as pl
from jax.experimental.pallas import tpu as pltpu


def doc_tower_kernel(tok_ref, fused_ref, b_ref, out_ref):
    """One batch tile of DocumentTower.forward.

    tok_ref  : (tb, L) int32   token ids for this batch tile
    fused_ref: (V, D)  bf16    (emb_table @ W.T) / L  — grid-invariant
    b_ref    : (1, D)  f32     bias row                — grid-invariant
    out_ref  : (tb, D) f32     transformed pooled embeddings
    """
    tb, L = tok_ref.shape
    V = fused_ref.shape[0]

    tok = tok_ref[...]                                          # (tb, L) int32
    vocab_ids = lax.broadcasted_iota(jnp.int32, (tb, V), 1)     # lane-dense (tb, V)

    # Token-id histogram over the sequence, built with a fully unrolled loop so
    # only a single lane-dense (tb, V) tile is ever live (no 3-D one-hot, no
    # cross-sublane reduction).  L is static (block shape), so this is L steps
    # of VPU compare+add.
    counts = jnp.zeros((tb, V), jnp.float32)
    for l in range(L):
        counts = counts + (tok[:, l:l + 1] == vocab_ids).astype(jnp.float32)

    # mean-pool + Linear fused into one MXU matmul:
    #   out = (counts / L) @ emb @ W.T + b  ==  counts @ fused + b
    # counts are exact small integers (<= L), hence exact in bf16; the 1/L
    # scale is already folded into `fused`.  Accumulation stays f32.
    y = jnp.dot(counts.astype(jnp.bfloat16), fused_ref[...],
                preferred_element_type=jnp.float32)             # (tb, D) f32
    out_ref[...] = (y + b_ref[...]).astype(out_ref.dtype)


def document_tower_forward(token_ids, emb_table, weight, bias, *, tb=None):
    """token_ids: (B, L) int; emb_table: (V, D); weight: (D, D) in PyTorch
    nn.Linear layout (out, in); bias: (D,).  Returns (B, D) float32."""
    B, L = token_ids.shape
    V, D = emb_table.shape
    token_ids = token_ids.astype(jnp.int32)

    # One-time fold of the Linear weight and the 1/L mean scale into the table
    # (model-load cost, so use highest precision), then bf16 for DMA / VMEM /
    # single-pass MXU.
    fused = jnp.matmul(emb_table.astype(jnp.float32),
                       weight.astype(jnp.float32).T,
                       precision=lax.Precision.HIGHEST) / L     # (V, D) f32
    fused = fused.astype(jnp.bfloat16)
    b2 = bias.reshape(1, D).astype(jnp.float32)

    # Batch tile: full batch when tiny, else a multiple of 8 (sublane rule).
    # The kernel is mem/overhead-bound, so prefer big tiles (token/output tiles
    # are tiny), but for B >= 16 keep the grid length >= 2 so the "parallel"
    # batch axis can shard across both v7x TensorCores.  Partial tail blocks
    # are handled by Pallas: out-of-range output rows are masked on writeback,
    # and padded token ids only feed compares, never addresses.
    if tb is None:
        if B <= 8:
            tb = B
        else:
            tb = min(1024, (B // 8) * 8)
            if B >= 16:
                tb = min(tb, max(8, ((B // 2) // 8) * 8))
    grid = (pl.cdiv(B, tb),)

    # Explicit VMEM budget: single-buffered constants + double-buffered
    # token/output tiles, 2x headroom, capped below v7x's 64 MiB physical.
    resident = fused.size * 2 + b2.size * 4
    streaming = 2 * (tb * L * 4 + tb * D * 4)
    vmem_limit = int(min(48 * 2**20, max(8 * 2**20, 2 * (resident + streaming))))

    # Honest cost hint: B*L*V VPU compares/adds (not MXU flops), one
    # (B,V)@(V,D) contraction, bias add; weight is folded so no D*D term.
    cost = pl.CostEstimate(
        flops=B * L * V + 2 * B * V * D + B * D,
        transcendentals=0,
        bytes_accessed=4 * B * L + 2 * V * D + 4 * D + 4 * B * D)

    def build(single_buffer_constants):
        if single_buffer_constants:
            def resident_spec(shape):
                return pl.BlockSpec(shape, lambda i: (0, 0),
                                    pipeline_mode=pl.Buffered(buffer_count=1))
        else:
            def resident_spec(shape):
                return pl.BlockSpec(shape, lambda i: (0, 0))

        # TODO(synk): for production D >= 128 the (tb, D) output block is
        # already lane-dense; if D stays < 128, pack 128/D batch rows per
        # output row (wrapper-side reshape) to avoid masked vst partial stores.
        # TODO(synk): for production vocabularies, add a V grid axis marked
        # "arbitrary" with a (tb, D) f32 scratch accumulator (stream the table
        # in tiles), or switch to a scalar-prefetch DMA gather once
        # V*D >> B*L*D; a fully VMEM-resident table only works for small V.
        return pl.pallas_call(
            doc_tower_kernel,
            out_shape=jax.ShapeDtypeStruct((B, D), jnp.float32),
            grid_spec=pltpu.PrefetchScalarGridSpec(
                num_scalar_prefetch=0,
                grid=grid,
                in_specs=[
                    pl.BlockSpec((tb, L), lambda i: (i, 0)),   # token-id tile
                    resident_spec((V, D)),                     # fused table
                    resident_spec((1, D)),                     # bias
                ],
                out_specs=pl.BlockSpec((tb, D), lambda i: (i, 0)),
            ),
            compiler_params=pltpu.CompilerParams(
                dimension_semantics=("parallel",),
                vmem_limit_bytes=vmem_limit),
            cost_estimate=cost,
        )

    try:
        return build(True)(token_ids, fused, b2)
    except Exception:
        # Fallback for JAX builds that reject pipeline_mode=pl.Buffered(1) on
        # pallas_call in_specs; identical kernel, default double-buffering.
        return build(False)(token_ids, fused, b2)


if __name__ == "__main__":
    key = jax.random.PRNGKey(0)
    k_tok, k_emb, k_w, k_b = jax.random.split(key, 4)

    # Small shapes implied by the module: batch=2, seq=8, vocab=64, embedding_dim=32
    B, L, V, D = 2, 8, 64, 32

    token_ids = jax.random.randint(k_tok, (B, L), 0, V, dtype=jnp.int32)
    emb_table = jax.random.normal(k_emb, (V, D), dtype=jnp.float32)
    weight = jax.random.normal(k_w, (D, D), dtype=jnp.float32) / jnp.sqrt(D)
    bias = jax.random.normal(k_b, (D,), dtype=jnp.float32) * 0.1

    out = jax.block_until_ready(
        document_tower_forward(token_ids, emb_table, weight, bias))

    # Reference: exact float64 gather -> mean -> linear (PyTorch semantics).
    emb64 = np.asarray(emb_table, dtype=np.float64)
    w64 = np.asarray(weight, dtype=np.float64)
    b64 = np.asarray(bias, dtype=np.float64)
    tok_np = np.asarray(token_ids)
    ref = emb64[tok_np].mean(axis=1) @ w64.T + b64

    assert out.shape == (B, D) and out.dtype == jnp.float32
    # Tolerance covers the bf16 rounding of the folded table (~5e-3 absolute
    # worst case here); semantic bugs (transposed W, missing 1/L, missing bias)
    # exceed it by >20x.
    assert np.allclose(np.asarray(out), ref, atol=1e-2, rtol=1e-2)
    print("KERNEL_OK")
</pallas_src>

<mosaic_0001>
module attributes {stable_mosaic.version = 11 : i64} {
  func.func @doc_tower_kernel(%arg0: i32, %arg1: memref<2x8xi32, #tpu.memory_space<vmem>>, %arg2: memref<64x32xbf16, #tpu.memory_space<vmem>>, %arg3: memref<1x32xf32, #tpu.memory_space<vmem>>, %arg4: memref<2x32xf32, #tpu.memory_space<vmem>>) attributes {dimension_semantics = [#tpu.dimension_semantics<parallel>], iteration_bounds = array<i64: 1>, scalar_prefetch = 0 : i64, scratch_operands = 0 : i64, tpu.core_type = #tpu.core_type<tc>, window_params = [{transform_indices = @transform_0, window_bounds = array<i64: 2, 8>}, {pipeline_mode = #tpu.pipeline_mode<synchronous>, transform_indices = @transform_1, window_bounds = array<i64: 64, 32>}, {pipeline_mode = #tpu.pipeline_mode<synchronous>, transform_indices = @transform_2, window_bounds = array<i64: 1, 32>}, {transform_indices = @transform_3, window_bounds = array<i64: 2, 32>}]} {
    %c0 = arith.constant 0 : index
    %c0_0 = arith.constant 0 : index
    %0 = vector.load %arg1[%c0, %c0_0] : memref<2x8xi32, #tpu.memory_space<vmem>>, vector<2x8xi32>
    %1 = tpu.iota {dimensions = array<i32: 1>} : vector<2x64xi32>
    %cst = arith.constant 0.000000e+00 : f32
    %2 = vector.broadcast %cst : f32 to vector<2x64xf32>
    %3 = vector.extract_strided_slice %0 {offsets = [0, 0], sizes = [2, 1], strides = [1, 1]} : vector<2x8xi32> to vector<2x1xi32>
    %4 = vector.broadcast %3 : vector<2x1xi32> to vector<2x64xi32>
    %5 = arith.cmpi eq, %4, %1 : vector<2x64xi32>
    %6 = arith.extui %5 : vector<2x64xi1> to vector<2x64xi32>
    %7 = arith.sitofp %6 : vector<2x64xi32> to vector<2x64xf32>
    %8 = arith.addf %2, %7 : vector<2x64xf32>
    %9 = vector.extract_strided_slice %0 {offsets = [0, 1], sizes = [2, 1], strides = [1, 1]} : vector<2x8xi32> to vector<2x1xi32>
    %10 = vector.broadcast %9 : vector<2x1xi32> to vector<2x64xi32>
    %11 = arith.cmpi eq, %10, %1 : vector<2x64xi32>
    %12 = arith.extui %11 : vector<2x64xi1> to vector<2x64xi32>
    %13 = arith.sitofp %12 : vector<2x64xi32> to vector<2x64xf32>
    %14 = arith.addf %8, %13 : vector<2x64xf32>
    %15 = vector.extract_strided_slice %0 {offsets = [0, 2], sizes = [2, 1], strides = [1, 1]} : vector<2x8xi32> to vector<2x1xi32>
    %16 = vector.broadcast %15 : vector<2x1xi32> to vector<2x64xi32>
    %17 = arith.cmpi eq, %16, %1 : vector<2x64xi32>
    %18 = arith.extui %17 : vector<2x64xi1> to vector<2x64xi32>
    %19 = arith.sitofp %18 : vector<2x64xi32> to vector<2x64xf32>
    %20 = arith.addf %14, %19 : vector<2x64xf32>
    %21 = vector.extract_strided_slice %0 {offsets = [0, 3], sizes = [2, 1], strides = [1, 1]} : vector<2x8xi32> to vector<2x1xi32>
    %22 = vector.broadcast %21 : vector<2x1xi32> to vector<2x64xi32>
    %23 = arith.cmpi eq, %22, %1 : vector<2x64xi32>
    %24 = arith.extui %23 : vector<2x64xi1> to vector<2x64xi32>
    %25 = arith.sitofp %24 : vector<2x64xi32> to vector<2x64xf32>
    %26 = arith.addf %20, %25 : vector<2x64xf32>
    %27 = vector.extract_strided_slice %0 {offsets = [0, 4], sizes = [2, 1], strides = [1, 1]} : vector<2x8xi32> to vector<2x1xi32>
    %28 = vector.broadcast %27 : vector<2x1xi32> to vector<2x64xi32>
    %29 = arith.cmpi eq, %28, %1 : vector<2x64xi32>
    %30 = arith.extui %29 : vector<2x64xi1> to vector<2x64xi32>
    %31 = arith.sitofp %30 : vector<2x64xi32> to vector<2x64xf32>
    %32 = arith.addf %26, %31 : vector<2x64xf32>
    %33 = vector.extract_strided_slice %0 {offsets = [0, 5], sizes = [2, 1], strides = [1, 1]} : vector<2x8xi32> to vector<2x1xi32>
    %34 = vector.broadcast %33 : vector<2x1xi32> to vector<2x64xi32>
    %35 = arith.cmpi eq, %34, %1 : vector<2x64xi32>
    %36 = arith.extui %35 : vector<2x64xi1> to vector<2x64xi32>
    %37 = arith.sitofp %36 : vector<2x64xi32> to vector<2x64xf32>
    %38 = arith.addf %32, %37 : vector<2x64xf32>
    %39 = vector.extract_strided_slice %0 {offsets = [0, 6], sizes = [2, 1], strides = [1, 1]} : vector<2x8xi32> to vector<2x1xi32>
    %40 = vector.broadcast %39 : vector<2x1xi32> to vector<2x64xi32>
    %41 = arith.cmpi eq, %40, %1 : vector<2x64xi32>
    %42 = arith.extui %41 : vector<2x64xi1> to vector<2x64xi32>
    %43 = arith.sitofp %42 : vector<2x64xi32> to vector<2x64xf32>
    %44 = arith.addf %38, %43 : vector<2x64xf32>
    %45 = vector.extract_strided_slice %0 {offsets = [0, 7], sizes = [2, 1], strides = [1, 1]} : vector<2x8xi32> to vector<2x1xi32>
    %46 = vector.broadcast %45 : vector<2x1xi32> to vector<2x64xi32>
    %47 = arith.cmpi eq, %46, %1 : vector<2x64xi32>
    %48 = arith.extui %47 : vector<2x64xi1> to vector<2x64xi32>
    %49 = arith.sitofp %48 : vector<2x64xi32> to vector<2x64xf32>
    %50 = arith.addf %44, %49 : vector<2x64xf32>
    %51 = arith.truncf %50 : vector<2x64xf32> to vector<2x64xbf16>
    %c0_1 = arith.constant 0 : index
    %c0_2 = arith.constant 0 : index
    %52 = vector.load %arg2[%c0_1, %c0_2] : memref<64x32xbf16, #tpu.memory_space<vmem>>, vector<64x32xbf16>
    %cst_3 = arith.constant dense<0.000000e+00> : vector<2x32xf32>
    %53 = tpu.matmul %51, %52, %cst_3 {dimension_numbers = #tpu.dot_dimension_numbers<[1], [0], [0], [1], [0, 0, 1, 1], [], []>} : vector<2x64xbf16>, vector<64x32xbf16>, vector<2x32xf32> -> vector<2x32xf32>
    %c0_4 = arith.constant 0 : index
    %c0_5 = arith.constant 0 : index
    %54 = vector.load %arg3[%c0_4, %c0_5] : memref<1x32xf32, #tpu.memory_space<vmem>>, vector<1x32xf32>
    %55 = vector.broadcast %54 : vector<1x32xf32> to vector<2x32xf32>
    %56 = arith.addf %53, %55 : vector<2x32xf32>
    %c0_6 = arith.constant 0 : index
    %c0_7 = arith.constant 0 : index
    %57 = vector.load %arg4[%c0_6, %c0_7] : memref<2x32xf32, #tpu.memory_space<vmem>>, vector<2x32xf32>
    tpu.vector_store %arg4[%c0_6, %c0_7], %56 {strides = array<i32>} : memref<2x32xf32, #tpu.memory_space<vmem>>, vector<2x32xf32>,
    return
  }
  func.func @transform_0(%arg0: i32) -> (i32, i32) {
    %c0_i32 = arith.constant 0 : i32
    %c0_i32_0 = arith.constant 0 : i32
    return %arg0, %c0_i32 : i32, i32
  }
  func.func @transform_1(%arg0: i32) -> (i32, i32) {
    %c0_i32 = arith.constant 0 : i32
    %c0_i32_0 = arith.constant 0 : i32
    %c0_i32_1 = arith.constant 0 : i32
    return %c0_i32, %c0_i32_0 : i32, i32
  }
  func.func @transform_2(%arg0: i32) -> (i32, i32) {
    %c0_i32 = arith.constant 0 : i32
    %c0_i32_0 = arith.constant 0 : i32
    %c0_i32_1 = arith.constant 0 : i32
    return %c0_i32, %c0_i32_0 : i32, i32
  }
  func.func @transform_3(%arg0: i32) -> (i32, i32) {
    %c0_i32 = arith.constant 0 : i32
    %c0_i32_0 = arith.constant 0 : i32
    return %arg0, %c0_i32 : i32, i32
  }
}

module attributes {stable_mosaic.version = 11 : i64} {
  func.func @doc_tower_kernel(%arg0: i32, %arg1: memref<2x8xi32, #tpu.memory_space<vmem>>, %arg2: memref<64x32xbf16, #tpu.memory_space<vmem>>, %arg3: memref<1x32xf32, #tpu.memory_space<vmem>>, %arg4: memref<2x32xf32, #tpu.memory_space<vmem>>) attributes {dimension_semantics = [#tpu.dimension_semantics<parallel>], iteration_bounds = array<i64: 1>, scalar_prefetch = 0 : i64, scratch_operands = 0 : i64, tpu.core_type = #tpu.core_type<tc>, window_params = [{transform_indices = @transform_0, window_bounds = array<i64: 2, 8>}, {pipeline_mode = #tpu.pipeline_mode<synchronous>, transform_indices = @transform_1, window_bounds = array<i64: 64, 32>}, {pipeline_mode = #tpu.pipeline_mode<synchronous>, transform_indices = @transform_2, window_bounds = array<i64: 1, 32>}, {transform_indices = @transform_3, window_bounds = array<i64: 2, 32>}]} {
    %c0 = arith.constant 0 : index
    %c0_0 = arith.constant 0 : index
    %0 = vector.load %arg1[%c0, %c0_0] : memref<2x8xi32, #tpu.memory_space<vmem>>, vector<2x8xi32>
    %1 = tpu.iota {dimensions = array<i32: 1>} : vector<2x64xi32>
    %cst = arith.constant 0.000000e+00 : f32
    %2 = vector.broadcast %cst : f32 to vector<2x64xf32>
    %3 = vector.extract_strided_slice %0 {offsets = [0, 0], sizes = [2, 1], strides = [1, 1]} : vector<2x8xi32> to vector<2x1xi32>
    %4 = vector.broadcast %3 : vector<2x1xi32> to vector<2x64xi32>
    %5 = arith.cmpi eq, %4, %1 : vector<2x64xi32>
    %6 = arith.extui %5 : vector<2x64xi1> to vector<2x64xi32>
    %7 = arith.sitofp %6 : vector<2x64xi32> to vector<2x64xf32>
    %8 = arith.addf %2, %7 : vector<2x64xf32>
    %9 = vector.extract_strided_slice %0 {offsets = [0, 1], sizes = [2, 1], strides = [1, 1]} : vector<2x8xi32> to vector<2x1xi32>
    %10 = vector.broadcast %9 : vector<2x1xi32> to vector<2x64xi32>
    %11 = arith.cmpi eq, %10, %1 : vector<2x64xi32>
    %12 = arith.extui %11 : vector<2x64xi1> to vector<2x64xi32>
    %13 = arith.sitofp %12 : vector<2x64xi32> to vector<2x64xf32>
    %14 = arith.addf %8, %13 : vector<2x64xf32>
    %15 = vector.extract_strided_slice %0 {offsets = [0, 2], sizes = [2, 1], strides = [1, 1]} : vector<2x8xi32> to vector<2x1xi32>
    %16 = vector.broadcast %15 : vector<2x1xi32> to vector<2x64xi32>
    %17 = arith.cmpi eq, %16, %1 : vector<2x64xi32>
    %18 = arith.extui %17 : vector<2x64xi1> to vector<2x64xi32>
    %19 = arith.sitofp %18 : vector<2x64xi32> to vector<2x64xf32>
    %20 = arith.addf %14, %19 : vector<2x64xf32>
    %21 = vector.extract_strided_slice %0 {offsets = [0, 3], sizes = [2, 1], strides = [1, 1]} : vector<2x8xi32> to vector<2x1xi32>
    %22 = vector.broadcast %21 : vector<2x1xi32> to vector<2x64xi32>
    %23 = arith.cmpi eq, %22, %1 : vector<2x64xi32>
    %24 = arith.extui %23 : vector<2x64xi1> to vector<2x64xi32>
    %25 = arith.sitofp %24 : vector<2x64xi32> to vector<2x64xf32>
    %26 = arith.addf %20, %25 : vector<2x64xf32>
    %27 = vector.extract_strided_slice %0 {offsets = [0, 4], sizes = [2, 1], strides = [1, 1]} : vector<2x8xi32> to vector<2x1xi32>
    %28 = vector.broadcast %27 : vector<2x1xi32> to vector<2x64xi32>
    %29 = arith.cmpi eq, %28, %1 : vector<2x64xi32>
    %30 = arith.extui %29 : vector<2x64xi1> to vector<2x64xi32>
    %31 = arith.sitofp %30 : vector<2x64xi32> to vector<2x64xf32>
    %32 = arith.addf %26, %31 : vector<2x64xf32>
    %33 = vector.extract_strided_slice %0 {offsets = [0, 5], sizes = [2, 1], strides = [1, 1]} : vector<2x8xi32> to vector<2x1xi32>
    %34 = vector.broadcast %33 : vector<2x1xi32> to vector<2x64xi32>
    %35 = arith.cmpi eq, %34, %1 : vector<2x64xi32>
    %36 = arith.extui %35 : vector<2x64xi1> to vector<2x64xi32>
    %37 = arith.sitofp %36 : vector<2x64xi32> to vector<2x64xf32>
    %38 = arith.addf %32, %37 : vector<2x64xf32>
    %39 = vector.extract_strided_slice %0 {offsets = [0, 6], sizes = [2, 1], strides = [1, 1]} : vector<2x8xi32> to vector<2x1xi32>
    %40 = vector.broadcast %39 : vector<2x1xi32> to vector<2x64xi32>
    %41 = arith.cmpi eq, %40, %1 : vector<2x64xi32>
    %42 = arith.extui %41 : vector<2x64xi1> to vector<2x64xi32>
    %43 = arith.sitofp %42 : vector<2x64xi32> to vector<2x64xf32>
    %44 = arith.addf %38, %43 : vector<2x64xf32>
    %45 = vector.extract_strided_slice %0 {offsets = [0, 7], sizes = [2, 1], strides = [1, 1]} : vector<2x8xi32> to vector<2x1xi32>
    %46 = vector.broadcast %45 : vector<2x1xi32> to vector<2x64xi32>
    %47 = arith.cmpi eq, %46, %1 : vector<2x64xi32>
    %48 = arith.extui %47 : vector<2x64xi1> to vector<2x64xi32>
    %49 = arith.sitofp %48 : vector<2x64xi32> to vector<2x64xf32>
    %50 = arith.addf %44, %49 : vector<2x64xf32>
    %51 = arith.truncf %50 : vector<2x64xf32> to vector<2x64xbf16>
    %c0_1 = arith.constant 0 : index
    %c0_2 = arith.constant 0 : index
    %52 = vector.load %arg2[%c0_1, %c0_2] : memref<64x32xbf16, #tpu.memory_space<vmem>>, vector<64x32xbf16>
    %cst_3 = arith.constant dense<0.000000e+00> : vector<2x32xf32>
    %53 = tpu.matmul %51, %52, %cst_3 {dimension_numbers = #tpu.dot_dimension_numbers<[1], [0], [0], [1], [0, 0, 1, 1], [], []>} : vector<2x64xbf16>, vector<64x32xbf16>, vector<2x32xf32> -> vector<2x32xf32>
    %c0_4 = arith.constant 0 : index
    %c0_5 = arith.constant 0 : index
    %54 = vector.load %arg3[%c0_4, %c0_5] : memref<1x32xf32, #tpu.memory_space<vmem>>, vector<1x32xf32>
    %55 = vector.broadcast %54 : vector<1x32xf32> to vector<2x32xf32>
    %56 = arith.addf %53, %55 : vector<2x32xf32>
    %c0_6 = arith.constant 0 : index
    %c0_7 = arith.constant 0 : index
    %57 = vector.load %arg4[%c0_6, %c0_7] : memref<2x32xf32, #tpu.memory_space<vmem>>, vector<2x32xf32>
    tpu.vector_store %arg4[%c0_6, %c0_7], %56 {strides = array<i32>} : memref<2x32xf32, #tpu.memory_space<vmem>>, vector<2x32xf32>,
    return
  }
  func.func @transform_0(%arg0: i32) -> (i32, i32) {
    %c0_i32 = arith.constant 0 : i32
    %c0_i32_0 = arith.constant 0 : i32
    return %arg0, %c0_i32 : i32, i32
  }
  func.func @transform_1(%arg0: i32) -> (i32, i32) {
    %c0_i32 = arith.constant 0 : i32
    %c0_i32_0 = arith.constant 0 : i32
    %c0_i32_1 = arith.constant 0 : i32
    return %c0_i32, %c0_i32_0 : i32, i32
  }
  func.func @transform_2(%arg0: i32) -> (i32, i32) {
    %c0_i32 = arith.constant 0 : i32
    %c0_i32_0 = arith.constant 0 : i32
    %c0_i32_1 = arith.constant 0 : i32
    return %c0_i32, %c0_i32_0 : i32, i32
  }
  func.func @transform_3(%arg0: i32) -> (i32, i32) {
    %c0_i32 = arith.constant 0 : i32
    %c0_i32_0 = arith.constant 0 : i32
    return %arg0, %c0_i32 : i32, i32
  }
}

</mosaic_0001>

<llo_original>
// kernel: tpu_custom_call.1
$region0: #{tpu_custom_call.1}
  #allocation0 [shape = 'u32[]', space=smem, size = 0x4, offset = 0x4, fixed_abs, tag = 'smem constant byte address 0x4 - core index']
  #allocation1 [shape = 'u32[144,128]{1,0:T(1,128)}', space=vmem, size = 0x12000, scoped, tag = 'internal scratch']
  %s0 = inlined_call_operand.vmem [shape: s32[2,8], index: 0, kind: input, shape index: {}]
  %s1 = inlined_call_operand.vmem [shape: bf16[64,32], index: 1, kind: input, shape index: {}]
  %s2 = inlined_call_operand.vmem [shape: f32[1,32], index: 2, kind: input, shape index: {}]
  %s3 = inlined_call_operand.hbm [shape: f32[2,32], index: 3, kind: output, shape index: {}]
  %s4 = sld [smem:[#allocation0]]
  $region22: #{tpu_custom_call.1} parent=0
    _
  %s6 = ssub.s32 1, %s4
  %s7 = scalar_select 0, %s6, %s4
  $region1: #{tpu_custom_call.1} parent=0
    #allocation2 [shape = 'u8[1024]{0}', space=vmem, size = 0x400, scoped, tag = 'output window, operand 0, single buffered']
    #allocation3 [shape = 's32[1]{0}', space=sflag, size = 0x4, scoped, tag = 'scoped memory for tpu_custom_call.1']
    %8 = vsyncpa [#allocation3], 0
    // Predicated region
    $region2: #{tpu_custom_call.1} parent=1 // pred_check
      _
    $region3: #{tpu_custom_call.1} parent=1 // pred_check_branch
      %10 = sbr.rel (0) target = $region5
    $region4: #{tpu_custom_call.1} parent=1 // pred_region
      _
    $region5: #{tpu_custom_call.1} parent=1 // pred_fallthru
      _
    // Predicated region
    $region6: #{tpu_custom_call.1} parent=1 // pred_check
      _
    $region7: #{tpu_custom_call.1} parent=1 // pred_check_branch
      %12 = sbr.rel (0) target = $region9
    $region8: #{tpu_custom_call.1} parent=1 // pred_region
      _
    $region9: #{tpu_custom_call.1} parent=1 // pred_fallthru
      _
    // Predicated region
    $region10: #{tpu_custom_call.1} parent=1 // pred_check
      _
    $region11: #{tpu_custom_call.1} parent=1 // pred_check_branch
      %14 = sbr.rel (0) target = $region13
    $region12: #{tpu_custom_call.1} parent=1 // pred_region
      _
    $region13: #{tpu_custom_call.1} parent=1 // pred_fallthru
      _
    %v16 = vld [vmem:[%s0] sm:$0x3]
    %v17 = vlaneseq
    %v18 = vand.u32 %v17, 127
    %19 = vset.pattern.permute.xlu0 0
    %20 = vperm.xlu0 %19, %v16
    %v21 = vpop.permute.xlu0 %20
    %vm22 = vcmp.eq.s32.totalorder %v21, %v18
    %v23 = vsel %vm22, 1, 0
    %v24 = vcvt.s32.f32 %v23
    %v25 = vadd.f32 %v24, 0.0
    %26 = vset.pattern.permute.xlu0 1
    %27 = vperm.xlu0 %26, %v16
    %v28 = vpop.permute.xlu0 %27
    %vm29 = vcmp.eq.s32.totalorder %v28, %v18
    %v30 = vsel %vm29, 1, 0
    %v31 = vcvt.s32.f32 %v30
    %v32 = vadd.f32 %v25, %v31
    %33 = vset.pattern.permute.xlu0 2
    %34 = vperm.xlu0 %33, %v16
    %v35 = vpop.permute.xlu0 %34
    %vm36 = vcmp.eq.s32.totalorder %v35, %v18
    %v37 = vsel %vm36, 1, 0
    %v38 = vcvt.s32.f32 %v37
    %v39 = vadd.f32 %v32, %v38
    %40 = vset.pattern.permute.xlu0 3
    %41 = vperm.xlu0 %40, %v16
    %v42 = vpop.permute.xlu0 %41
    %vm43 = vcmp.eq.s32.totalorder %v42, %v18
    %v44 = vsel %vm43, 1, 0
    %v45 = vcvt.s32.f32 %v44
    %v46 = vadd.f32 %v39, %v45
    %47 = vset.pattern.permute.xlu0 4
    %48 = vperm.xlu0 %47, %v16
    %v49 = vpop.permute.xlu0 %48
    %vm50 = vcmp.eq.s32.totalorder %v49, %v18
    %v51 = vsel %vm50, 1, 0
    %v52 = vcvt.s32.f32 %v51
    %v53 = vadd.f32 %v46, %v52
    %54 = vset.pattern.permute.xlu0 5
    %55 = vperm.xlu0 %54, %v16
    %v56 = vpop.permute.xlu0 %55
    %vm57 = vcmp.eq.s32.totalorder %v56, %v18
    %v58 = vsel %vm57, 1, 0
    %v59 = vcvt.s32.f32 %v58
    %v60 = vadd.f32 %v53, %v59
    %61 = vset.pattern.permute.xlu0 6
    %62 = vperm.xlu0 %61, %v16
    %v63 = vpop.permute.xlu0 %62
    %vm64 = vcmp.eq.s32.totalorder %v63, %v18
    %v65 = vsel %vm64, 1, 0
    %v66 = vcvt.s32.f32 %v65
    %v67 = vadd.f32 %v60, %v66
    %68 = vset.pattern.permute.xlu0 7
    %69 = vperm.xlu0 %68, %v16
    %v70 = vpop.permute.xlu0 %69
    %vm71 = vcmp.eq.s32.totalorder %v70, %v18
    %v72 = vsel %vm71, 1, 0
    %v73 = vcvt.s32.f32 %v72
    %v74 = vadd.f32 %v67, %v73
    %v75 = vpack.c.bf16 %v74, %v74
    %v76 = vld [vmem:[%s1] sm:$0xf]
    %v77 = vld [vmem:[%s1 + $0x4] sm:$0xf]
    %v78 = vld [vmem:[%s1 + $0x8] sm:$0xf]
    %v79 = vld [vmem:[%s1 + $0xc] sm:$0xf]
    %v80 = vld [vmem:[%s1 + $0x10] sm:$0xf]
    %v81 = vld [vmem:[%s1 + $0x14] sm:$0xf]
    %v82 = vld [vmem:[%s1 + $0x18] sm:$0xf]
    %v83 = vld [vmem:[%s1 + $0x1c] sm:$0xf]
    %v84 = vld [vmem:[%s2] sm:$0x1]
    %v86 = vlaneseq
    %v87 = vshrl.u32 %v86, 7
    %v88 = vsub.s32 0, %v87
    %v89 = vrot.slane %v84, %v88
    %v99 = vunpack.c.l.b16 %v76
    %v100 = vunpack.c.l.b16 %v77
    %v101 = vunpack.c.l.b16 %v78
    %v102 = vunpack.c.l.b16 %v79
    %v103 = vunpack.c.l.b16 %v80
    %v104 = vunpack.c.l.b16 %v81
    %v105 = vunpack.c.l.b16 %v82
    %v106 = vunpack.c.l.b16 %v83
    %v107 = vpack.c.b16 %v100, %v99
    %v108 = vpack.c.b16 %v102, %v101
    %v109 = vpack.c.b16 %v104, %v103
    %v110 = vpack.c.b16 %v106, %v105
    %vm115 = vcmask 523264
    %v117 = vsel %vm115, %v75, 0
    %119 = vmatprep.subr.bf16.mxu0 0
    %120 = vmatpush1.bf16.msra.mxu0 %v107
    %121 = vmatprep.subr.bf16.mxu0 0
    %122 = vmatpush1.bf16.msra.mxu0 %v108
    %123 = vmatprep.subr.bf16.mxu0 0
    %124 = vmatpush1.bf16.msra.mxu0 %v109
    %125 = vmatprep.subr.bf16.mxu0 0
    %126 = vmatpush1.bf16.msra.mxu0 %v110
    %127 = vmatprep.subr.bf16.mxu0 0
    %128 = vmatpush1.bf16.msra.mxu0 0
    %129 = vmatprep.subr.bf16.mxu0 0
    %130 = vmatpush1.bf16.msra.mxu0 0
    %131 = vmatprep.subr.bf16.mxu0 0
    %132 = vmatpush1.bf16.msra.mxu0 0
    %133 = vmatprep.subr.bf16.mxu0 0
    %134 = vmatpush1.bf16.msra.mxu0 0
    %135 = vmatprep.subr.bf16.mxu0 0
    %136 = vmatpush1.bf16.msra.mxu0 0
    %137 = vmatprep.subr.bf16.mxu0 0
    %138 = vmatpush1.bf16.msra.mxu0 0
    %139 = vmatprep.subr.bf16.mxu0 0
    %140 = vmatpush1.bf16.msra.mxu0 0
    %141 = vmatprep.subr.bf16.mxu0 0
    %142 = vmatpush1.bf16.msra.mxu0 0
    %143 = vmatprep.subr.bf16.mxu0 0
    %144 = vmatpush1.bf16.msra.mxu0 0
    %145 = vmatprep.subr.bf16.mxu0 0
    %146 = vmatpush1.bf16.msra.mxu0 0
    %147 = vmatprep.subr.bf16.mxu0 0
    %148 = vmatpush1.bf16.msra.mxu0 0
    %149 = vmatprep.subr.bf16.mxu0 0
    %150 = vmatpush1.bf16.msra.mxu0 0
    %151 = vmatprep.mubr.bf16.mxu0 0
    %152 = vmatmul.mubr.bf16.gmra.mrb[0].mxu0 %v117
    %v153 = vpop.f32.mrb[0].mxu0
    %v154 = vadd.f32 %v89, %v153
    %v155 = vpop.f32.mrb[0].mxu0
    %v156 = vpop.f32.mrb[0].mxu0
    %v157 = vpop.f32.mrb[0].mxu0
    %158 = vdwg.mxu0
    %vm159 = vcmask 254976
    %160 = vst.msk [vmem:[#allocation2] sm:$0x3] %vm159, %v154
    // Predicated region
    $region14: #{tpu_custom_call.1} parent=1 // pred_check
      _
    $region15: #{tpu_custom_call.1} parent=1 // pred_check_branch
      %162 = sbr.rel (0) target = $region17
    $region16: #{tpu_custom_call.1} parent=1 // pred_region
      %s164 = ssub.s32 32, 32
      %165 = vsyncadd [#allocation3], %s164
      %s167 = sshll.u32 [#allocation2], 4
      %s168 = int_to_ptr.vmem [resolvable:$true] %s167
      %170 = dma.vmem_to_hbm [thread:$0]  %s168, 32, %s3, [#allocation3]
    $region17: #{tpu_custom_call.1} parent=1 // pred_fallthru
      _
    // Predicated region
    $region18: #{tpu_custom_call.1} parent=1 // pred_check
      _
    $region19: #{tpu_custom_call.1} parent=1 // pred_check_branch
      %172 = sbr.rel (0) target = $region21
    $region20: #{tpu_custom_call.1} parent=1 // pred_region
      %173 = dma.done [#allocation3], 32
    $region21: #{tpu_custom_call.1} parent=1 // pred_fallthru
      _
    %174 = vsyncpa [#allocation3], 1

// kernel: tpu_custom_call.1
$region0: #{tpu_custom_call.1}
  #allocation0 [shape = 'u32[]', space=smem, size = 0x4, offset = 0x4, fixed_abs, tag = 'smem constant byte address 0x4 - core index']
  #allocation1 [shape = 'u32[144,128]{1,0:T(1,128)}', space=vmem, size = 0x12000, scoped, tag = 'internal scratch']
  %s0 = inlined_call_operand.vmem [shape: s32[2,8], index: 0, kind: input, shape index: {}]
  %s1 = inlined_call_operand.vmem [shape: bf16[64,32], index: 1, kind: input, shape index: {}]
  %s2 = inlined_call_operand.vmem [shape: f32[1,32], index: 2, kind: input, shape index: {}]
  %s3 = inlined_call_operand.hbm [shape: f32[2,32], index: 3, kind: output, shape index: {}]
  %s4 = sld [smem:[#allocation0]]
  $region22: #{tpu_custom_call.1} parent=0
    _
  %s6 = ssub.s32 1, %s4
  %s7 = scalar_select 0, %s6, %s4
  $region1: #{tpu_custom_call.1} parent=0
    #allocation2 [shape = 'u8[1024]{0}', space=vmem, size = 0x400, scoped, tag = 'output window, operand 0, single buffered']
    #allocation3 [shape = 's32[1]{0}', space=sflag, size = 0x4, scoped, tag = 'scoped memory for tpu_custom_call.1']
    %8 = vsyncpa [#allocation3], 0
    // Predicated region
    $region2: #{tpu_custom_call.1} parent=1 // pred_check
      _
    $region3: #{tpu_custom_call.1} parent=1 // pred_check_branch
      %10 = sbr.rel (0) target = $region5
    $region4: #{tpu_custom_call.1} parent=1 // pred_region
      _
    $region5: #{tpu_custom_call.1} parent=1 // pred_fallthru
      _
    // Predicated region
    $region6: #{tpu_custom_call.1} parent=1 // pred_check
      _
    $region7: #{tpu_custom_call.1} parent=1 // pred_check_branch
      %12 = sbr.rel (0) target = $region9
    $region8: #{tpu_custom_call.1} parent=1 // pred_region
      _
    $region9: #{tpu_custom_call.1} parent=1 // pred_fallthru
      _
    // Predicated region
    $region10: #{tpu_custom_call.1} parent=1 // pred_check
      _
    $region11: #{tpu_custom_call.1} parent=1 // pred_check_branch
      %14 = sbr.rel (0) target = $region13
    $region12: #{tpu_custom_call.1} parent=1 // pred_region
      _
    $region13: #{tpu_custom_call.1} parent=1 // pred_fallthru
      _
    %v16 = vld [vmem:[%s0] sm:$0x3]
    %v17 = vlaneseq
    %v18 = vand.u32 %v17, 127
    %19 = vset.pattern.permute.xlu0 0
    %20 = vperm.xlu0 %19, %v16
    %v21 = vpop.permute.xlu0 %20
    %vm22 = vcmp.eq.s32.totalorder %v21, %v18
    %v23 = vsel %vm22, 1, 0
    %v24 = vcvt.s32.f32 %v23
    %v25 = vadd.f32 %v24, 0.0
    %26 = vset.pattern.permute.xlu0 1
    %27 = vperm.xlu0 %26, %v16
    %v28 = vpop.permute.xlu0 %27
    %vm29 = vcmp.eq.s32.totalorder %v28, %v18
    %v30 = vsel %vm29, 1, 0
    %v31 = vcvt.s32.f32 %v30
    %v32 = vadd.f32 %v25, %v31
    %33 = vset.pattern.permute.xlu0 2
    %34 = vperm.xlu0 %33, %v16
    %v35 = vpop.permute.xlu0 %34
    %vm36 = vcmp.eq.s32.totalorder %v35, %v18
    %v37 = vsel %vm36, 1, 0
    %v38 = vcvt.s32.f32 %v37
    %v39 = vadd.f32 %v32, %v38
    %40 = vset.pattern.permute.xlu0 3
    %41 = vperm.xlu0 %40, %v16
    %v42 = vpop.permute.xlu0 %41
    %vm43 = vcmp.eq.s32.totalorder %v42, %v18
    %v44 = vsel %vm43, 1, 0
    %v45 = vcvt.s32.f32 %v44
    %v46 = vadd.f32 %v39, %v45
    %47 = vset.pattern.permute.xlu0 4
    %48 = vperm.xlu0 %47, %v16
    %v49 = vpop.permute.xlu0 %48
    %vm50 = vcmp.eq.s32.totalorder %v49, %v18
    %v51 = vsel %vm50, 1, 0
    %v52 = vcvt.s32.f32 %v51
    %v53 = vadd.f32 %v46, %v52
    %54 = vset.pattern.permute.xlu0 5
    %55 = vperm.xlu0 %54, %v16
    %v56 = vpop.permute.xlu0 %55
    %vm57 = vcmp.eq.s32.totalorder %v56, %v18
    %v58 = vsel %vm57, 1, 0
    %v59 = vcvt.s32.f32 %v58
    %v60 = vadd.f32 %v53, %v59
    %61 = vset.pattern.permute.xlu0 6
    %62 = vperm.xlu0 %61, %v16
    %v63 = vpop.permute.xlu0 %62
    %vm64 = vcmp.eq.s32.totalorder %v63, %v18
    %v65 = vsel %vm64, 1, 0
    %v66 = vcvt.s32.f32 %v65
    %v67 = vadd.f32 %v60, %v66
    %68 = vset.pattern.permute.xlu0 7
    %69 = vperm.xlu0 %68, %v16
    %v70 = vpop.permute.xlu0 %69
    %vm71 = vcmp.eq.s32.totalorder %v70, %v18
    %v72 = vsel %vm71, 1, 0
    %v73 = vcvt.s32.f32 %v72
    %v74 = vadd.f32 %v67, %v73
    %v75 = vpack.c.bf16 %v74, %v74
    %v76 = vld [vmem:[%s1] sm:$0xf]
    %v77 = vld [vmem:[%s1 + $0x4] sm:$0xf]
    %v78 = vld [vmem:[%s1 + $0x8] sm:$0xf]
    %v79 = vld [vmem:[%s1 + $0xc] sm:$0xf]
    %v80 = vld [vmem:[%s1 + $0x10] sm:$0xf]
    %v81 = vld [vmem:[%s1 + $0x14] sm:$0xf]
    %v82 = vld [vmem:[%s1 + $0x18] sm:$0xf]
    %v83 = vld [vmem:[%s1 + $0x1c] sm:$0xf]
    %v84 = vld [vmem:[%s2] sm:$0x1]
    %v86 = vlaneseq
    %v87 = vshrl.u32 %v86, 7
    %v88 = vsub.s32 0, %v87
    %v89 = vrot.slane %v84, %v88
    %v99 = vunpack.c.l.b16 %v76
    %v100 = vunpack.c.l.b16 %v77
    %v101 = vunpack.c.l.b16 %v78
    %v102 = vunpack.c.l.b16 %v79
    %v103 = vunpack.c.l.b16 %v80
    %v104 = vunpack.c.l.b16 %v81
    %v105 = vunpack.c.l.b16 %v82
    %v106 = vunpack.c.l.b16 %v83
    %v107 = vpack.c.b16 %v100, %v99
    %v108 = vpack.c.b16 %v102, %v101
    %v109 = vpack.c.b16 %v104, %v103
    %v110 = vpack.c.b16 %v106, %v105
    %vm115 = vcmask 523264
    %v117 = vsel %vm115, %v75, 0
    %119 = vmatprep.subr.bf16.mxu0 0
    %120 = vmatpush1.bf16.msra.mxu0 %v107
    %121 = vmatprep.subr.bf16.mxu0 0
    %122 = vmatpush1.bf16.msra.mxu0 %v108
    %123 = vmatprep.subr.bf16.mxu0 0
    %124 = vmatpush1.bf16.msra.mxu0 %v109
    %125 = vmatprep.subr.bf16.mxu0 0
    %126 = vmatpush1.bf16.msra.mxu0 %v110
    %127 = vmatprep.subr.bf16.mxu0 0
    %128 = vmatpush1.bf16.msra.mxu0 0
    %129 = vmatprep.subr.bf16.mxu0 0
    %130 = vmatpush1.bf16.msra.mxu0 0
    %131 = vmatprep.subr.bf16.mxu0 0
    %132 = vmatpush1.bf16.msra.mxu0 0
    %133 = vmatprep.subr.bf16.mxu0 0
    %134 = vmatpush1.bf16.msra.mxu0 0
    %135 = vmatprep.subr.bf16.mxu0 0
    %136 = vmatpush1.bf16.msra.mxu0 0
    %137 = vmatprep.subr.bf16.mxu0 0
    %138 = vmatpush1.bf16.msra.mxu0 0
    %139 = vmatprep.subr.bf16.mxu0 0
    %140 = vmatpush1.bf16.msra.mxu0 0
    %141 = vmatprep.subr.bf16.mxu0 0
    %142 = vmatpush1.bf16.msra.mxu0 0
    %143 = vmatprep.subr.bf16.mxu0 0
    %144 = vmatpush1.bf16.msra.mxu0 0
    %145 = vmatprep.subr.bf16.mxu0 0
    %146 = vmatpush1.bf16.msra.mxu0 0
    %147 = vmatprep.subr.bf16.mxu0 0
    %148 = vmatpush1.bf16.msra.mxu0 0
    %149 = vmatprep.subr.bf16.mxu0 0
    %150 = vmatpush1.bf16.msra.mxu0 0
    %151 = vmatprep.mubr.bf16.mxu0 0
    %152 = vmatmul.mubr.bf16.gmra.mrb[0].mxu0 %v117
    %v153 = vpop.f32.mrb[0].mxu0
    %v154 = vadd.f32 %v89, %v153
    %v155 = vpop.f32.mrb[0].mxu0
    %v156 = vpop.f32.mrb[0].mxu0
    %v157 = vpop.f32.mrb[0].mxu0
    %158 = vdwg.mxu0
    %vm159 = vcmask 254976
    %160 = vst.msk [vmem:[#allocation2] sm:$0x3] %vm159, %v154
    // Predicated region
    $region14: #{tpu_custom_call.1} parent=1 // pred_check
      _
    $region15: #{tpu_custom_call.1} parent=1 // pred_check_branch
      %162 = sbr.rel (0) target = $region17
    $region16: #{tpu_custom_call.1} parent=1 // pred_region
      %s164 = ssub.s32 32, 32
      %165 = vsyncadd [#allocation3], %s164
      %s167 = sshll.u32 [#allocation2], 4
      %s168 = int_to_ptr.vmem [resolvable:$true] %s167
      %170 = dma.vmem_to_hbm [thread:$0]  %s168, 32, %s3, [#allocation3]
    $region17: #{tpu_custom_call.1} parent=1 // pred_fallthru
      _
    // Predicated region
    $region18: #{tpu_custom_call.1} parent=1 // pred_check
      _
    $region19: #{tpu_custom_call.1} parent=1 // pred_check_branch
      %172 = sbr.rel (0) target = $region21
    $region20: #{tpu_custom_call.1} parent=1 // pred_region
      %173 = dma.done [#allocation3], 32
    $region21: #{tpu_custom_call.1} parent=1 // pred_fallthru
      _
    %174 = vsyncpa [#allocation3], 1

</llo_original>
